<compile_context>
chip_gen: v7x
topology: tpu7x:2x2x1
jax: 0.10.0
libtpu: 0.0.40
codegen_flags: <defaults>
</compile_context>

<pallas_src>
import jax
import jax.numpy as jnp
from jax.experimental import pallas as pl
from jax.experimental.pallas import tpu as pltpu

EPS = 1e-5

# Logical dims (match the PyTorch module defaults).
IN_DIM, HID, LAT = 200, 100, 50

# Lane-padded dims (multiples of 128).
LANE = 128
P_IN = ((IN_DIM + LANE - 1) // LANE) * LANE    # 256
P_HID = ((HID + LANE - 1) // LANE) * LANE      # 128
P_LAT = ((LAT + LANE - 1) // LANE) * LANE      # 128
assert P_HID == P_LAT  # lets us stack w2/w3 into one [P_HID+P_LAT, 128] slab

# Offsets into the packed per-feature parameter vector (all lane-aligned).
O_G1 = 0
O_BE1 = O_G1 + P_HID
O_B2 = O_BE1 + P_HID
O_G2 = O_B2 + P_LAT
O_BE2 = O_G2 + P_HID
O_B4 = O_BE2 + P_HID
VEC_LEN = O_B4 + P_IN                          # 896 = 7 * 128


def _autoencoder_kernel(x_ref, w1_ref, w23_ref, w4_ref, vec_ref, out_ref):
    # Static, lane-aligned views into the packed parameter vector.
    g1 = vec_ref[:, O_G1:O_G1 + P_HID]
    be1 = vec_ref[:, O_BE1:O_BE1 + P_HID]
    b2 = vec_ref[:, O_B2:O_B2 + P_LAT]
    g2 = vec_ref[:, O_G2:O_G2 + P_HID]
    be2 = vec_ref[:, O_BE2:O_BE2 + P_HID]
    b4 = vec_ref[:, O_B4:O_B4 + P_IN]

    x = x_ref[...]

    # ---- encoder: Linear(200->100) -> BN(train stats) -> ReLU -> Dropout(0) ----
    # (Linear bias b1 omitted: exactly cancelled by the BN mean subtraction.)
    h = jnp.dot(x, w1_ref[...], preferred_element_type=jnp.float32)
    mu = jnp.mean(h, axis=0, keepdims=True)
    hc = h - mu
    var = jnp.mean(hc * hc, axis=0, keepdims=True)
    s = g1 * jax.lax.rsqrt(var + EPS)          # folded BN scale (rsqrt on EUP)
    h = jnp.maximum(hc * s + be1, 0.0)         # normalize + affine + ReLU

    # Linear(100->50)
    z = jnp.dot(h, w23_ref[0:P_HID, :], preferred_element_type=jnp.float32) + b2

    # ---- decoder: Linear(50->100) -> BN -> ReLU -> Dropout(0) ----
    # (Linear bias b3 omitted: cancelled by BN mean subtraction.)
    d = jnp.dot(z, w23_ref[P_HID:P_HID + P_LAT, :],
                preferred_element_type=jnp.float32)
    mu2 = jnp.mean(d, axis=0, keepdims=True)
    dc = d - mu2
    var2 = jnp.mean(dc * dc, axis=0, keepdims=True)
    s2 = g2 * jax.lax.rsqrt(var2 + EPS)
    d = jnp.maximum(dc * s2 + be2, 0.0)

    # Linear(100->200) -> Sigmoid (divide lands on the EUP reciprocal unit)
    o = jnp.dot(d, w4_ref[...], preferred_element_type=jnp.float32) + b4
    out_ref[...] = pl.reciprocal(1.0 + jnp.exp(-o), approx=False)


def _pad2(a, rows, cols):
    return jnp.pad(a, ((0, rows - a.shape[0]), (0, cols - a.shape[1])))


def autoencoder_forward(data, params):
    """data: [B, IN_DIM] float32; params: dict (see init_params). Returns [B, IN_DIM]."""
    B, in_dim = data.shape
    assert in_dim == IN_DIM

    # Wrapper-side zero-padding to lane-dense shapes (exact: see header comment).
    xp = _pad2(data.astype(jnp.float32), B, P_IN)
    w1p = _pad2(params["w1"], P_IN, P_HID)
    w23 = jnp.concatenate(
        [_pad2(params["w2"], P_HID, P_LAT), _pad2(params["w3"], P_LAT, P_HID)],
        axis=0)
    w4p = _pad2(params["w4"], P_HID, P_IN)
    vec = jnp.concatenate(
        [
            _pad2(params["g1"], 1, P_HID),
            _pad2(params["be1"], 1, P_HID),
            _pad2(params["b2"], 1, P_LAT),
            _pad2(params["g2"], 1, P_HID),
            _pad2(params["be2"], 1, P_HID),
            _pad2(params["b4"], 1, P_IN),
        ],
        axis=1)
    assert vec.shape == (1, VEC_LEN)

    vmem = pl.BlockSpec(memory_space=pltpu.MemorySpace.VMEM)
    out_padded = pl.pallas_call(
        _autoencoder_kernel,
        out_shape=jax.ShapeDtypeStruct((B, P_IN), jnp.float32),
        in_specs=[vmem] * 5,
        out_specs=vmem,
    )(xp, w1p, w23, w4p, vec)

    return out_padded[:, :IN_DIM]


def init_params(key, input_dim=IN_DIM, hidden=HID, latent=LAT):
    """Synthetic parameters with PyTorch-like shapes, Linear weights transposed to [in, out]."""
    ks = jax.random.split(key, 8)
    s = 0.05
    return {
        # encoder
        "w1": s * jax.random.normal(ks[0], (input_dim, hidden), jnp.float32),
        "b1": s * jax.random.normal(ks[1], (1, hidden), jnp.float32),
        "g1": jnp.ones((1, hidden), jnp.float32),     # BatchNorm1d weight init = 1
        "be1": jnp.zeros((1, hidden), jnp.float32),   # BatchNorm1d bias init = 0
        "w2": s * jax.random.normal(ks[2], (hidden, latent), jnp.float32),
        "b2": s * jax.random.normal(ks[3], (1, latent), jnp.float32),
        # decoder
        "w3": s * jax.random.normal(ks[4], (latent, hidden), jnp.float32),
        "b3": s * jax.random.normal(ks[5], (1, hidden), jnp.float32),
        "g2": jnp.ones((1, hidden), jnp.float32),
        "be2": jnp.zeros((1, hidden), jnp.float32),
        "w4": s * jax.random.normal(ks[6], (hidden, input_dim), jnp.float32),
        "b4": s * jax.random.normal(ks[7], (1, input_dim), jnp.float32),
    }


def _reference_forward(data, p):
    """Pure-JAX reference mirroring PyTorch train-mode semantics (includes b1/b3)."""
    h = data @ p["w1"] + p["b1"]
    mu = h.mean(0, keepdims=True)
    var = ((h - mu) ** 2).mean(0, keepdims=True)
    h = jnp.maximum(p["g1"] * (h - mu) / jnp.sqrt(var + EPS) + p["be1"], 0.0)
    z = h @ p["w2"] + p["b2"]
    d = z @ p["w3"] + p["b3"]
    mu2 = d.mean(0, keepdims=True)
    var2 = ((d - mu2) ** 2).mean(0, keepdims=True)
    d = jnp.maximum(p["g2"] * (d - mu2) / jnp.sqrt(var2 + EPS) + p["be2"], 0.0)
    o = d @ p["w4"] + p["b4"]
    return jax.nn.sigmoid(o)


if __name__ == "__main__":
    key = jax.random.PRNGKey(0)
    k_data, k_params = jax.random.split(key)

    B = 8
    data = jax.random.uniform(k_data, (B, IN_DIM), jnp.float32)  # autoencoder inputs in [0,1)
    params = init_params(k_params)

    out = autoencoder_forward(data, params)
    out = jax.block_until_ready(out)

    ref = _reference_forward(data, params)
    assert out.shape == (B, IN_DIM)
    assert jnp.allclose(out, ref, atol=1e-5, rtol=1e-5), float(jnp.max(jnp.abs(out - ref)))

    print("KERNEL_OK")
</pallas_src>

<mosaic_0001>
module attributes {stable_mosaic.version = 11 : i64} {
  func.func @_autoencoder_kernel(%arg0: memref<8x256xf32, #tpu.memory_space<vmem>>, %arg1: memref<256x128xf32, #tpu.memory_space<vmem>>, %arg2: memref<256x128xf32, #tpu.memory_space<vmem>>, %arg3: memref<128x256xf32, #tpu.memory_space<vmem>>, %arg4: memref<1x896xf32, #tpu.memory_space<vmem>>, %arg5: memref<8x256xf32, #tpu.memory_space<vmem>>) attributes {dimension_semantics = [], scalar_prefetch = 0 : i64, scratch_operands = 0 : i64, tpu.core_type = #tpu.core_type<tc>} {
    %c0 = arith.constant 0 : index
    %c0_0 = arith.constant 0 : index
    %0 = vector.load %arg4[%c0, %c0_0] : memref<1x896xf32, #tpu.memory_space<vmem>>, vector<1x128xf32>
    %c0_1 = arith.constant 0 : index
    %c128 = arith.constant 128 : index
    %1 = vector.load %arg4[%c0_1, %c128] : memref<1x896xf32, #tpu.memory_space<vmem>>, vector<1x128xf32>
    %c0_2 = arith.constant 0 : index
    %c256 = arith.constant 256 : index
    %2 = vector.load %arg4[%c0_2, %c256] : memref<1x896xf32, #tpu.memory_space<vmem>>, vector<1x128xf32>
    %c0_3 = arith.constant 0 : index
    %c384 = arith.constant 384 : index
    %3 = vector.load %arg4[%c0_3, %c384] : memref<1x896xf32, #tpu.memory_space<vmem>>, vector<1x128xf32>
    %c0_4 = arith.constant 0 : index
    %c512 = arith.constant 512 : index
    %4 = vector.load %arg4[%c0_4, %c512] : memref<1x896xf32, #tpu.memory_space<vmem>>, vector<1x128xf32>
    %c0_5 = arith.constant 0 : index
    %c640 = arith.constant 640 : index
    %5 = vector.load %arg4[%c0_5, %c640] : memref<1x896xf32, #tpu.memory_space<vmem>>, vector<1x256xf32>
    %c0_6 = arith.constant 0 : index
    %c0_7 = arith.constant 0 : index
    %6 = vector.load %arg0[%c0_6, %c0_7] : memref<8x256xf32, #tpu.memory_space<vmem>>, vector<8x256xf32>
    %c0_8 = arith.constant 0 : index
    %c0_9 = arith.constant 0 : index
    %7 = vector.load %arg1[%c0_8, %c0_9] : memref<256x128xf32, #tpu.memory_space<vmem>>, vector<256x128xf32>
    %cst = arith.constant dense<0.000000e+00> : vector<8x128xf32>
    %8 = tpu.matmul %6, %7, %cst {dimension_numbers = #tpu.dot_dimension_numbers<[1], [0], [0], [1], [0, 0, 1, 1], [], []>} : vector<8x256xf32>, vector<256x128xf32>, vector<8x128xf32> -> vector<8x128xf32>
    %cst_10 = arith.constant dense<0.000000e+00> : vector<128xf32>
    %9 = vector.multi_reduction <add>, %8, %cst_10 [0] : vector<8x128xf32> to vector<128xf32>
    %10 = vector.shape_cast %9 : vector<128xf32> to vector<1x128xf32>
    %cst_11 = arith.constant 8.000000e+00 : f32
    %11 = vector.broadcast %cst_11 : f32 to vector<1x128xf32>
    %12 = arith.divf %10, %11 : vector<1x128xf32>
    %13 = vector.broadcast %12 : vector<1x128xf32> to vector<8x128xf32>
    %14 = arith.subf %8, %13 : vector<8x128xf32>
    %15 = arith.mulf %14, %14 : vector<8x128xf32>
    %cst_12 = arith.constant dense<0.000000e+00> : vector<128xf32>
    %16 = vector.multi_reduction <add>, %15, %cst_12 [0] : vector<8x128xf32> to vector<128xf32>
    %17 = vector.shape_cast %16 : vector<128xf32> to vector<1x128xf32>
    %cst_13 = arith.constant 8.000000e+00 : f32
    %18 = vector.broadcast %cst_13 : f32 to vector<1x128xf32>
    %19 = arith.divf %17, %18 : vector<1x128xf32>
    %cst_14 = arith.constant 9.99999974E-6 : f32
    %20 = vector.broadcast %cst_14 : f32 to vector<1x128xf32>
    %21 = arith.addf %19, %20 : vector<1x128xf32>
    %22 = math.rsqrt %21 : vector<1x128xf32>
    %23 = arith.mulf %0, %22 : vector<1x128xf32>
    %24 = vector.broadcast %23 : vector<1x128xf32> to vector<8x128xf32>
    %25 = arith.mulf %14, %24 : vector<8x128xf32>
    %26 = vector.broadcast %1 : vector<1x128xf32> to vector<8x128xf32>
    %27 = arith.addf %25, %26 : vector<8x128xf32>
    %cst_15 = arith.constant 0.000000e+00 : f32
    %28 = vector.broadcast %cst_15 : f32 to vector<8x128xf32>
    %29 = arith.maximumf %27, %28 : vector<8x128xf32>
    %c0_16 = arith.constant 0 : index
    %c0_17 = arith.constant 0 : index
    %30 = vector.load %arg2[%c0_16, %c0_17] : memref<256x128xf32, #tpu.memory_space<vmem>>, vector<128x128xf32>
    %cst_18 = arith.constant dense<0.000000e+00> : vector<8x128xf32>
    %31 = tpu.matmul %29, %30, %cst_18 {dimension_numbers = #tpu.dot_dimension_numbers<[1], [0], [0], [1], [0, 0, 1, 1], [], []>} : vector<8x128xf32>, vector<128x128xf32>, vector<8x128xf32> -> vector<8x128xf32>
    %32 = vector.broadcast %2 : vector<1x128xf32> to vector<8x128xf32>
    %33 = arith.addf %31, %32 : vector<8x128xf32>
    %c128_19 = arith.constant 128 : index
    %c0_20 = arith.constant 0 : index
    %34 = vector.load %arg2[%c128_19, %c0_20] : memref<256x128xf32, #tpu.memory_space<vmem>>, vector<128x128xf32>
    %cst_21 = arith.constant dense<0.000000e+00> : vector<8x128xf32>
    %35 = tpu.matmul %33, %34, %cst_21 {dimension_numbers = #tpu.dot_dimension_numbers<[1], [0], [0], [1], [0, 0, 1, 1], [], []>} : vector<8x128xf32>, vector<128x128xf32>, vector<8x128xf32> -> vector<8x128xf32>
    %cst_22 = arith.constant dense<0.000000e+00> : vector<128xf32>
    %36 = vector.multi_reduction <add>, %35, %cst_22 [0] : vector<8x128xf32> to vector<128xf32>
    %37 = vector.shape_cast %36 : vector<128xf32> to vector<1x128xf32>
    %cst_23 = arith.constant 8.000000e+00 : f32
    %38 = vector.broadcast %cst_23 : f32 to vector<1x128xf32>
    %39 = arith.divf %37, %38 : vector<1x128xf32>
    %40 = vector.broadcast %39 : vector<1x128xf32> to vector<8x128xf32>
    %41 = arith.subf %35, %40 : vector<8x128xf32>
    %42 = arith.mulf %41, %41 : vector<8x128xf32>
    %cst_24 = arith.constant dense<0.000000e+00> : vector<128xf32>
    %43 = vector.multi_reduction <add>, %42, %cst_24 [0] : vector<8x128xf32> to vector<128xf32>
    %44 = vector.shape_cast %43 : vector<128xf32> to vector<1x128xf32>
    %cst_25 = arith.constant 8.000000e+00 : f32
    %45 = vector.broadcast %cst_25 : f32 to vector<1x128xf32>
    %46 = arith.divf %44, %45 : vector<1x128xf32>
    %cst_26 = arith.constant 9.99999974E-6 : f32
    %47 = vector.broadcast %cst_26 : f32 to vector<1x128xf32>
    %48 = arith.addf %46, %47 : vector<1x128xf32>
    %49 = math.rsqrt %48 : vector<1x128xf32>
    %50 = arith.mulf %3, %49 : vector<1x128xf32>
    %51 = vector.broadcast %50 : vector<1x128xf32> to vector<8x128xf32>
    %52 = arith.mulf %41, %51 : vector<8x128xf32>
    %53 = vector.broadcast %4 : vector<1x128xf32> to vector<8x128xf32>
    %54 = arith.addf %52, %53 : vector<8x128xf32>
    %cst_27 = arith.constant 0.000000e+00 : f32
    %55 = vector.broadcast %cst_27 : f32 to vector<8x128xf32>
    %56 = arith.maximumf %54, %55 : vector<8x128xf32>
    %c0_28 = arith.constant 0 : index
    %c0_29 = arith.constant 0 : index
    %57 = vector.load %arg3[%c0_28, %c0_29] : memref<128x256xf32, #tpu.memory_space<vmem>>, vector<128x256xf32>
    %cst_30 = arith.constant dense<0.000000e+00> : vector<8x256xf32>
    %58 = tpu.matmul %56, %57, %cst_30 {dimension_numbers = #tpu.dot_dimension_numbers<[1], [0], [0], [1], [0, 0, 1, 1], [], []>} : vector<8x128xf32>, vector<128x256xf32>, vector<8x256xf32> -> vector<8x256xf32>
    %59 = vector.broadcast %5 : vector<1x256xf32> to vector<8x256xf32>
    %60 = arith.addf %58, %59 : vector<8x256xf32>
    %cst_31 = arith.constant 0.000000e+00 : f32
    %61 = vector.broadcast %cst_31 : f32 to vector<8x256xf32>
    %62 = arith.subf %61, %60 : vector<8x256xf32>
    %63 = math.exp %62 : vector<8x256xf32>
    %cst_32 = arith.constant 1.000000e+00 : f32
    %64 = vector.broadcast %cst_32 : f32 to vector<8x256xf32>
    %65 = arith.addf %64, %63 : vector<8x256xf32>
    %66 = tpu.reciprocal %65 : vector<8x256xf32> -> vector<8x256xf32>
    %c0_33 = arith.constant 0 : index
    %c0_34 = arith.constant 0 : index
    %67 = vector.load %arg5[%c0_33, %c0_34] : memref<8x256xf32, #tpu.memory_space<vmem>>, vector<8x256xf32>
    tpu.vector_store %arg5[%c0_33, %c0_34], %66 {strides = array<i32>} : memref<8x256xf32, #tpu.memory_space<vmem>>, vector<8x256xf32>,
    return
  }
}

</mosaic_0001>

<llo_original>
// kernel: tpu_custom_call.1
$region0: #{tpu_custom_call.1}
  #allocation0 [shape = 'u32[]', space=smem, size = 0x4, offset = 0x4, fixed_abs, tag = 'smem constant byte address 0x4 - core index']
  #allocation1 [shape = 'u32[144,128]{1,0:T(1,128)}', space=vmem, size = 0x12000, scoped, tag = 'internal scratch']
  %s0 = inlined_call_operand.hbm [shape: f32[8,256], index: 0, kind: input, shape index: {}]
  %s1 = inlined_call_operand.hbm [shape: f32[256,128], index: 1, kind: input, shape index: {}]
  %s2 = inlined_call_operand.hbm [shape: f32[256,128], index: 2, kind: input, shape index: {}]
  %s3 = inlined_call_operand.hbm [shape: f32[128,256], index: 3, kind: input, shape index: {}]
  %s4 = inlined_call_operand.vmem [shape: f32[1,896], index: 4, kind: input, shape index: {}]
  %s5 = inlined_call_operand.hbm [shape: f32[8,256], index: 5, kind: output, shape index: {}]
  %s6 = sld [smem:[#allocation0]]
  $region46: #{tpu_custom_call.1} parent=0
    _
  %s8 = ssub.s32 1, %s6
  %s9 = scalar_select 0, %s8, %s6
  $region1: #{tpu_custom_call.1} parent=0
    #allocation2 [shape = 'u8[8192]{0}', space=vmem, size = 0x2000, scoped, tag = 'input window, operand 0, single buffered']
    #allocation3 [shape = 's32[1]{0}', space=sflag, size = 0x4, scoped, tag = 'scoped memory for tpu_custom_call.1']
    #allocation4 [shape = 's32[1]{0}', space=sflag, size = 0x4, scoped, tag = 'scoped memory for tpu_custom_call.1']
    #allocation5 [shape = 'u8[131072]{0}', space=vmem, size = 0x20000, scoped, tag = 'input window, operand 1, single buffered']
    #allocation6 [shape = 's32[1]{0}', space=sflag, size = 0x4, scoped, tag = 'scoped memory for tpu_custom_call.1']
    #allocation7 [shape = 'u8[131072]{0}', space=vmem, size = 0x20000, scoped, tag = 'input window, operand 2, single buffered']
    #allocation8 [shape = 'u8[131072]{0}', space=vmem, size = 0x20000, scoped, tag = 'input window, operand 3, single buffered']
    #allocation9 [shape = 's32[1]{0}', space=sflag, size = 0x4, scoped, tag = 'scoped memory for tpu_custom_call.1']
    #allocation10 [shape = 'u8[8192]{0}', space=vmem, size = 0x2000, scoped, tag = 'output window, operand 0, single buffered']
    %10 = vsyncpa [#allocation3], 0
    %11 = vsyncpa [#allocation6], 0
    %12 = vsyncpa [#allocation9], 0
    %13 = vsyncpa [#allocation4], 0
    // Predicated region
    $region2: #{tpu_custom_call.1} parent=1 // pred_check
      _
    $region3: #{tpu_custom_call.1} parent=1 // pred_check_branch
      %15 = sbr.rel (0) target = $region5
    $region4: #{tpu_custom_call.1} parent=1 // pred_region
      %s17 = ssub.s32 256, 256
      %18 = vsyncadd [#allocation3], %s17
      %s20 = sshll.u32 [#allocation2], 4
      %s21 = int_to_ptr.vmem [resolvable:$true] %s20
      %23 = dma.hbm_to_vmem [thread:$0]  %s0, 256, %s21, [#allocation3]
    $region5: #{tpu_custom_call.1} parent=1 // pred_fallthru
      _
    // Predicated region
    $region6: #{tpu_custom_call.1} parent=1 // pred_check
      _
    $region7: #{tpu_custom_call.1} parent=1 // pred_check_branch
      %25 = sbr.rel (0) target = $region9
    $region8: #{tpu_custom_call.1} parent=1 // pred_region
      %s27 = ssub.s32 4096, 4096
      %28 = vsyncadd [#allocation6], %s27
      %s29 = sshll.u32 [#allocation5], 4
      %s30 = int_to_ptr.vmem [resolvable:$true] %s29
      %35 = dma.hbm_to_vmem [thread:$0]  %s1, 4096, %s30, [#allocation6], 128, 128, 8
    $region9: #{tpu_custom_call.1} parent=1 // pred_fallthru
      _
    // Predicated region
    $region10: #{tpu_custom_call.1} parent=1 // pred_check
      _
    $region11: #{tpu_custom_call.1} parent=1 // pred_check_branch
      %37 = sbr.rel (0) target = $region13
    $region12: #{tpu_custom_call.1} parent=1 // pred_region
      %s39 = ssub.s32 4096, 4096
      %40 = vsyncadd [#allocation6], %s39
      %s41 = sshll.u32 [#allocation7], 4
      %s42 = int_to_ptr.vmem [resolvable:$true] %s41
      %47 = dma.hbm_to_vmem [thread:$0]  %s2, 4096, %s42, [#allocation6], 128, 128, 8
    $region13: #{tpu_custom_call.1} parent=1 // pred_fallthru
      _
    // Predicated region
    $region14: #{tpu_custom_call.1} parent=1 // pred_check
      _
    $region15: #{tpu_custom_call.1} parent=1 // pred_check_branch
      %49 = sbr.rel (0) target = $region17
    $region16: #{tpu_custom_call.1} parent=1 // pred_region
      %s51 = ssub.s32 4096, 4096
      %52 = vsyncadd [#allocation9], %s51
      %s53 = sshll.u32 [#allocation8], 4
      %s54 = int_to_ptr.vmem [resolvable:$true] %s53
      %59 = dma.hbm_to_vmem [thread:$0]  %s3, 4096, %s54, [#allocation9], 256, 256, 16
    $region17: #{tpu_custom_call.1} parent=1 // pred_fallthru
      _
    // Predicated region
    $region18: #{tpu_custom_call.1} parent=1 // pred_check
      _
    $region19: #{tpu_custom_call.1} parent=1 // pred_check_branch
      %61 = sbr.rel (0) target = $region21
    $region20: #{tpu_custom_call.1} parent=1 // pred_region
      _
    $region21: #{tpu_custom_call.1} parent=1 // pred_fallthru
      _
    // Predicated region
    $region22: #{tpu_custom_call.1} parent=1 // pred_check
      _
    $region23: #{tpu_custom_call.1} parent=1 // pred_check_branch
      %63 = sbr.rel (0) target = $region25
    $region24: #{tpu_custom_call.1} parent=1 // pred_region
      %64 = dma.done [#allocation3], 256
    $region25: #{tpu_custom_call.1} parent=1 // pred_fallthru
      _
    // Predicated region
    $region26: #{tpu_custom_call.1} parent=1 // pred_check
      _
    $region27: #{tpu_custom_call.1} parent=1 // pred_check_branch
      %66 = sbr.rel (0) target = $region29
    $region28: #{tpu_custom_call.1} parent=1 // pred_region
      %67 = dma.done [#allocation6], 4096
    $region29: #{tpu_custom_call.1} parent=1 // pred_fallthru
      _
    // Predicated region
    $region30: #{tpu_custom_call.1} parent=1 // pred_check
      _
    $region31: #{tpu_custom_call.1} parent=1 // pred_check_branch
      %69 = sbr.rel (0) target = $region33
    $region32: #{tpu_custom_call.1} parent=1 // pred_region
      %70 = dma.done [#allocation6], 4096
    $region33: #{tpu_custom_call.1} parent=1 // pred_fallthru
      _
    // Predicated region
    $region34: #{tpu_custom_call.1} parent=1 // pred_check
      _
    $region35: #{tpu_custom_call.1} parent=1 // pred_check_branch
      %72 = sbr.rel (0) target = $region37
    $region36: #{tpu_custom_call.1} parent=1 // pred_region
      %73 = dma.done [#allocation9], 4096
    $region37: #{tpu_custom_call.1} parent=1 // pred_fallthru
      _
    %v74 = vld [vmem:[%s4] sm:$0x1]
    %v75 = vld [vmem:[%s4 + $0x1] sm:$0x1]
    %v76 = vld [vmem:[%s4 + $0x2] sm:$0x1]
    %v77 = vld [vmem:[%s4 + $0x3] sm:$0x1]
    %v78 = vld [vmem:[%s4 + $0x4] sm:$0x1]
    %v79 = vld [vmem:[%s4 + $0x5] sm:$0x3]
    %v80 = vld [vmem:[#allocation2] sm:$0xff]
    %v81 = vld [vmem:[#allocation2 + $0x8] sm:$0xff]
    %v82 = vld [vmem:[#allocation5] sm:$0xff]
    %v83 = vld [vmem:[#allocation5 + $0x8] sm:$0xff]
    %v84 = vld [vmem:[#allocation5 + $0x10] sm:$0xff]
    %v85 = vld [vmem:[#allocation5 + $0x18] sm:$0xff]
    %v86 = vld [vmem:[#allocation5 + $0x20] sm:$0xff]
    %v87 = vld [vmem:[#allocation5 + $0x28] sm:$0xff]
    %v88 = vld [vmem:[#allocation5 + $0x30] sm:$0xff]
    %v89 = vld [vmem:[#allocation5 + $0x38] sm:$0xff]
    %v90 = vld [vmem:[#allocation5 + $0x40] sm:$0xff]
    %v91 = vld [vmem:[#allocation5 + $0x48] sm:$0xff]
    %v92 = vld [vmem:[#allocation5 + $0x50] sm:$0xff]
    %v93 = vld [vmem:[#allocation5 + $0x58] sm:$0xff]
    %v94 = vld [vmem:[#allocation5 + $0x60] sm:$0xff]
    %v95 = vld [vmem:[#allocation5 + $0x68] sm:$0xff]
    %v96 = vld [vmem:[#allocation5 + $0x70] sm:$0xff]
    %v97 = vld [vmem:[#allocation5 + $0x78] sm:$0xff]
    %v98 = vld [vmem:[#allocation5 + $0x80] sm:$0xff]
    %v99 = vld [vmem:[#allocation5 + $0x88] sm:$0xff]
    %v100 = vld [vmem:[#allocation5 + $0x90] sm:$0xff]
    %v101 = vld [vmem:[#allocation5 + $0x98] sm:$0xff]
    %v102 = vld [vmem:[#allocation5 + $0xa0] sm:$0xff]
    %v103 = vld [vmem:[#allocation5 + $0xa8] sm:$0xff]
    %v104 = vld [vmem:[#allocation5 + $0xb0] sm:$0xff]
    %v105 = vld [vmem:[#allocation5 + $0xb8] sm:$0xff]
    %v106 = vld [vmem:[#allocation5 + $0xc0] sm:$0xff]
    %v107 = vld [vmem:[#allocation5 + $0xc8] sm:$0xff]
    %v108 = vld [vmem:[#allocation5 + $0xd0] sm:$0xff]
    %v109 = vld [vmem:[#allocation5 + $0xd8] sm:$0xff]
    %v110 = vld [vmem:[#allocation5 + $0xe0] sm:$0xff]
    %v111 = vld [vmem:[#allocation5 + $0xe8] sm:$0xff]
    %v112 = vld [vmem:[#allocation5 + $0xf0] sm:$0xff]
    %v113 = vld [vmem:[#allocation5 + $0xf8] sm:$0xff]
    %114 = vmatprep.subr.mxu0 0.0
    %115 = vmatpush1.msra.mxu0 %v82
    %116 = vmatprep.subr.mxu0 0.0
    %117 = vmatpush1.msra.mxu0 %v83
    %118 = vmatprep.subr.mxu0 0.0
    %119 = vmatpush1.msra.mxu0 %v84
    %120 = vmatprep.subr.mxu0 0.0
    %121 = vmatpush1.msra.mxu0 %v85
    %122 = vmatprep.subr.mxu0 0.0
    %123 = vmatpush1.msra.mxu0 %v86
    %124 = vmatprep.subr.mxu0 0.0
    %125 = vmatpush1.msra.mxu0 %v87
    %126 = vmatprep.subr.mxu0 0.0
    %127 = vmatpush1.msra.mxu0 %v88
    %128 = vmatprep.subr.mxu0 0.0
    %129 = vmatpush1.msra.mxu0 %v89
    %130 = vmatprep.subr.mxu0 0.0
    %131 = vmatpush1.msra.mxu0 %v90
    %132 = vmatprep.subr.mxu0 0.0
    %133 = vmatpush1.msra.mxu0 %v91
    %134 = vmatprep.subr.mxu0 0.0
    %135 = vmatpush1.msra.mxu0 %v92
    %136 = vmatprep.subr.mxu0 0.0
    %137 = vmatpush1.msra.mxu0 %v93
    %138 = vmatprep.subr.mxu0 0.0
    %139 = vmatpush1.msra.mxu0 %v94
    %140 = vmatprep.subr.mxu0 0.0
    %141 = vmatpush1.msra.mxu0 %v95
    %142 = vmatprep.subr.mxu0 0.0
    %143 = vmatpush1.msra.mxu0 %v96
    %144 = vmatprep.subr.mxu0 0.0
    %145 = vmatpush1.msra.mxu0 %v97
    %146 = vmatprep.subr.mxu0 0.0
    %147 = vmatpush1.msra.mxu0 %v98
    %148 = vmatprep.subr.mxu0 0.0
    %149 = vmatpush1.msra.mxu0 %v99
    %150 = vmatprep.subr.mxu0 0.0
    %151 = vmatpush1.msra.mxu0 %v100
    %152 = vmatprep.subr.mxu0 0.0
    %153 = vmatpush1.msra.mxu0 %v101
    %154 = vmatprep.subr.mxu0 0.0
    %155 = vmatpush1.msra.mxu0 %v102
    %156 = vmatprep.subr.mxu0 0.0
    %157 = vmatpush1.msra.mxu0 %v103
    %158 = vmatprep.subr.mxu0 0.0
    %159 = vmatpush1.msra.mxu0 %v104
    %160 = vmatprep.subr.mxu0 0.0
    %161 = vmatpush1.msra.mxu0 %v105
    %162 = vmatprep.subr.mxu0 0.0
    %163 = vmatpush1.msra.mxu0 %v106
    %164 = vmatprep.subr.mxu0 0.0
    %165 = vmatpush1.msra.mxu0 %v107
    %166 = vmatprep.subr.mxu0 0.0
    %167 = vmatpush1.msra.mxu0 %v108
    %168 = vmatprep.subr.mxu0 0.0
    %169 = vmatpush1.msra.mxu0 %v109
    %170 = vmatprep.subr.mxu0 0.0
    %171 = vmatpush1.msra.mxu0 %v110
    %172 = vmatprep.subr.mxu0 0.0
    %173 = vmatpush1.msra.mxu0 %v111
    %174 = vmatprep.subr.mxu0 0.0
    %175 = vmatpush1.msra.mxu0 %v112
    %176 = vmatprep.subr.mxu0 0.0
    %177 = vmatpush1.msra.mxu0 %v113
    %178 = vmatprep.mubr.f32.mxu0 %v81
    %179 = vmatmul.mubr.f32.gmra.mrb[0].mxu0 %v80
    %v180 = vpop.f32.mrb[0].mxu0
    %v181 = vadd.f32 0.0, %v180
    %v182 = vpop.f32.mrb[0].mxu0
    %183 = vdwg.mxu0
    %v184 = vrot.slane %v181, 4
    %v185 = vadd.f32 %v181, %v184
    %v186 = vrot.slane %v185, 2
    %v187 = vadd.f32 %v185, %v186
    %v188 = vrot.slane %v187, 1
    %v189 = vadd.f32 %v187, %v188
    %v190 = vrcp.pop 8.0
    %v191 = vmul.f32 %v189, %v190
    %v192 = vsub.f32 %v181, %v191
    %v193 = vmul.f32 %v192, %v192
    %v194 = vrot.slane %v193, 4
    %v195 = vadd.f32 %v193, %v194
    %v196 = vrot.slane %v195, 2
    %v197 = vadd.f32 %v195, %v196
    %v198 = vrot.slane %v197, 1
    %v199 = vadd.f32 %v197, %v198
    %v200 = vmul.f32 %v199, %v190
    %v201 = vadd.f32 %v200, 1e-05
    %v202 = vrsqrt.pop %v201
    %v203 = vmul.f32 %v74, %v202
    %v205 = vlaneseq
    %v206 = vshrl.u32 %v205, 7
    %v207 = vsub.s32 0, %v206
    %v208 = vrot.slane %v203, %v207
    %v210 = vmul.f32 %v192, %v208
    %v212 = vlaneseq
    %v213 = vshrl.u32 %v212, 7
    %v214 = vsub.s32 0, %v213
    %v215 = vrot.slane %v75, %v214
    %v217 = vadd.f32 %v210, %v215
    %v218 = vmax.f32 %v217, 0.0
    %v219 = vld [vmem:[#allocation7] sm:$0xff]
    %v220 = vld [vmem:[#allocation7 + $0x8] sm:$0xff]
    %v221 = vld [vmem:[#allocation7 + $0x10] sm:$0xff]
    %v222 = vld [vmem:[#allocation7 + $0x18] sm:$0xff]
    %v223 = vld [vmem:[#allocation7 + $0x20] sm:$0xff]
    %v224 = vld [vmem:[#allocation7 + $0x28] sm:$0xff]
    %v225 = vld [vmem:[#allocation7 + $0x30] sm:$0xff]
    %v226 = vld [vmem:[#allocation7 + $0x38] sm:$0xff]
    %v227 = vld [vmem:[#allocation7 + $0x40] sm:$0xff]
    %v228 = vld [vmem:[#allocation7 + $0x48] sm:$0xff]
    %v229 = vld [vmem:[#allocation7 + $0x50] sm:$0xff]
    %v230 = vld [vmem:[#allocation7 + $0x58] sm:$0xff]
    %v231 = vld [vmem:[#allocation7 + $0x60] sm:$0xff]
    %v232 = vld [vmem:[#allocation7 + $0x68] sm:$0xff]
    %v233 = vld [vmem:[#allocation7 + $0x70] sm:$0xff]
    %v234 = vld [vmem:[#allocation7 + $0x78] sm:$0xff]
    %v236 = vlaneseq
    %v237 = vshrl.u32 %v236, 7
    %v238 = vsub.s32 0, %v237
    %v239 = vrot.slane %v76, %v238
    %241 = vmatprep.subr.mxu0 0.0
    %242 = vmatpush1.msra.mxu0 %v219
    %243 = vmatprep.subr.mxu0 0.0
    %244 = vmatpush1.msra.mxu0 %v220
    %245 = vmatprep.subr.mxu0 0.0
    %246 = vmatpush1.msra.mxu0 %v221
    %247 = vmatprep.subr.mxu0 0.0
    %248 = vmatpush1.msra.mxu0 %v222
    %249 = vmatprep.subr.mxu0 0.0
    %250 = vmatpush1.msra.mxu0 %v223
    %251 = vmatprep.subr.mxu0 0.0
    %252 = vmatpush1.msra.mxu0 %v224
    %253 = vmatprep.subr.mxu0 0.0
    %254 = vmatpush1.msra.mxu0 %v225
    %255 = vmatprep.subr.mxu0 0.0
    %256 = vmatpush1.msra.mxu0 %v226
    %257 = vmatprep.subr.mxu0 0.0
    %258 = vmatpush1.msra.mxu0 %v227
    %259 = vmatprep.subr.mxu0 0.0
    %260 = vmatpush1.msra.mxu0 %v228
    %261 = vmatprep.subr.mxu0 0.0
    %262 = vmatpush1.msra.mxu0 %v229
    %263 = vmatprep.subr.mxu0 0.0
    %264 = vmatpush1.msra.mxu0 %v230
    %265 = vmatprep.subr.mxu0 0.0
    %266 = vmatpush1.msra.mxu0 %v231
    %267 = vmatprep.subr.mxu0 0.0
    %268 = vmatpush1.msra.mxu0 %v232
    %269 = vmatprep.subr.mxu0 0.0
    %270 = vmatpush1.msra.mxu0 %v233
    %271 = vmatprep.subr.mxu0 0.0
    %272 = vmatpush1.msra.mxu0 %v234
    %273 = vmatprep.subr.mxu0 0.0
    %274 = vmatpush1.msra.mxu0 0.0
    %275 = vmatprep.subr.mxu0 0.0
    %276 = vmatpush1.msra.mxu0 0.0
    %277 = vmatprep.subr.mxu0 0.0
    %278 = vmatpush1.msra.mxu0 0.0
    %279 = vmatprep.subr.mxu0 0.0
    %280 = vmatpush1.msra.mxu0 0.0
    %281 = vmatprep.subr.mxu0 0.0
    %282 = vmatpush1.msra.mxu0 0.0
    %283 = vmatprep.subr.mxu0 0.0
    %284 = vmatpush1.msra.mxu0 0.0
    %285 = vmatprep.subr.mxu0 0.0
    %286 = vmatpush1.msra.mxu0 0.0
    %287 = vmatprep.subr.mxu0 0.0
    %288 = vmatpush1.msra.mxu0 0.0
    %289 = vmatprep.subr.mxu0 0.0
    %290 = vmatpush1.msra.mxu0 0.0
    %291 = vmatprep.subr.mxu0 0.0
    %292 = vmatpush1.msra.mxu0 0.0
    %293 = vmatprep.subr.mxu0 0.0
    %294 = vmatpush1.msra.mxu0 0.0
    %295 = vmatprep.subr.mxu0 0.0
    %296 = vmatpush1.msra.mxu0 0.0
    %297 = vmatprep.subr.mxu0 0.0
    %298 = vmatpush1.msra.mxu0 0.0
    %299 = vmatprep.subr.mxu0 0.0
    %300 = vmatpush1.msra.mxu0 0.0
    %301 = vmatprep.subr.mxu0 0.0
    %302 = vmatpush1.msra.mxu0 0.0
    %303 = vmatprep.subr.mxu0 0.0
    %304 = vmatpush1.msra.mxu0 0.0
    %305 = vmatprep.mubr.f32.mxu0 0.0
    %306 = vmatmul.mubr.f32.gmra.mrb[0].mxu0 %v218
    %v307 = vpop.f32.mrb[0].mxu0
    %v308 = vadd.f32 %v239, %v307
    %v309 = vpop.f32.mrb[0].mxu0
    %310 = vdwg.mxu0
    %v311 = vld [vmem:[#allocation7 + $0x80] sm:$0xff]
    %v312 = vld [vmem:[#allocation7 + $0x88] sm:$0xff]
    %v313 = vld [vmem:[#allocation7 + $0x90] sm:$0xff]
    %v314 = vld [vmem:[#allocation7 + $0x98] sm:$0xff]
    %v315 = vld [vmem:[#allocation7 + $0xa0] sm:$0xff]
    %v316 = vld [vmem:[#allocation7 + $0xa8] sm:$0xff]
    %v317 = vld [vmem:[#allocation7 + $0xb0] sm:$0xff]
    %v318 = vld [vmem:[#allocation7 + $0xb8] sm:$0xff]
    %v319 = vld [vmem:[#allocation7 + $0xc0] sm:$0xff]
    %v320 = vld [vmem:[#allocation7 + $0xc8] sm:$0xff]
    %v321 = vld [vmem:[#allocation7 + $0xd0] sm:$0xff]
    %v322 = vld [vmem:[#allocation7 + $0xd8] sm:$0xff]
    %v323 = vld [vmem:[#allocation7 + $0xe0] sm:$0xff]
    %v324 = vld [vmem:[#allocation7 + $0xe8] sm:$0xff]
    %v325 = vld [vmem:[#allocation7 + $0xf0] sm:$0xff]
    %v326 = vld [vmem:[#allocation7 + $0xf8] sm:$0xff]
    %327 = vmatprep.subr.mxu0 0.0
    %328 = vmatpush1.msra.mxu0 %v311
    %329 = vmatprep.subr.mxu0 0.0
    %330 = vmatpush1.msra.mxu0 %v312
    %331 = vmatprep.subr.mxu0 0.0
    %332 = vmatpush1.msra.mxu0 %v313
    %333 = vmatprep.subr.mxu0 0.0
    %334 = vmatpush1.msra.mxu0 %v314
    %335 = vmatprep.subr.mxu0 0.0
    %336 = vmatpush1.msra.mxu0 %v315
    %337 = vmatprep.subr.mxu0 0.0
    %338 = vmatpush1.msra.mxu0 %v316
    %339 = vmatprep.subr.mxu0 0.0
    %340 = vmatpush1.msra.mxu0 %v317
    %341 = vmatprep.subr.mxu0 0.0
    %342 = vmatpush1.msra.mxu0 %v318
    %343 = vmatprep.subr.mxu0 0.0
    %344 = vmatpush1.msra.mxu0 %v319
    %345 = vmatprep.subr.mxu0 0.0
    %346 = vmatpush1.msra.mxu0 %v320
    %347 = vmatprep.subr.mxu0 0.0
    %348 = vmatpush1.msra.mxu0 %v321
    %349 = vmatprep.subr.mxu0 0.0
    %350 = vmatpush1.msra.mxu0 %v322
    %351 = vmatprep.subr.mxu0 0.0
    %352 = vmatpush1.msra.mxu0 %v323
    %353 = vmatprep.subr.mxu0 0.0
    %354 = vmatpush1.msra.mxu0 %v324
    %355 = vmatprep.subr.mxu0 0.0
    %356 = vmatpush1.msra.mxu0 %v325
    %357 = vmatprep.subr.mxu0 0.0
    %358 = vmatpush1.msra.mxu0 %v326
    %359 = vmatprep.subr.mxu0 0.0
    %360 = vmatpush1.msra.mxu0 0.0
    %361 = vmatprep.subr.mxu0 0.0
    %362 = vmatpush1.msra.mxu0 0.0
    %363 = vmatprep.subr.mxu0 0.0
    %364 = vmatpush1.msra.mxu0 0.0
    %365 = vmatprep.subr.mxu0 0.0
    %366 = vmatpush1.msra.mxu0 0.0
    %367 = vmatprep.subr.mxu0 0.0
    %368 = vmatpush1.msra.mxu0 0.0
    %369 = vmatprep.subr.mxu0 0.0
    %370 = vmatpush1.msra.mxu0 0.0
    %371 = vmatprep.subr.mxu0 0.0
    %372 = vmatpush1.msra.mxu0 0.0
    %373 = vmatprep.subr.mxu0 0.0
    %374 = vmatpush1.msra.mxu0 0.0
    %375 = vmatprep.subr.mxu0 0.0
    %376 = vmatpush1.msra.mxu0 0.0
    %377 = vmatprep.subr.mxu0 0.0
    %378 = vmatpush1.msra.mxu0 0.0
    %379 = vmatprep.subr.mxu0 0.0
    %380 = vmatpush1.msra.mxu0 0.0
    %381 = vmatprep.subr.mxu0 0.0
    %382 = vmatpush1.msra.mxu0 0.0
    %383 = vmatprep.subr.mxu0 0.0
    %384 = vmatpush1.msra.mxu0 0.0
    %385 = vmatprep.subr.mxu0 0.0
    %386 = vmatpush1.msra.mxu0 0.0
    %387 = vmatprep.subr.mxu0 0.0
    %388 = vmatpush1.msra.mxu0 0.0
    %389 = vmatprep.subr.mxu0 0.0
    %390 = vmatpush1.msra.mxu0 0.0
    %391 = vmatprep.mubr.f32.mxu0 0.0
    %392 = vmatmul.mubr.f32.gmra.mrb[0].mxu0 %v308
    %v393 = vpop.f32.mrb[0].mxu0
    %v394 = vadd.f32 0.0, %v393
    %v395 = vpop.f32.mrb[0].mxu0
    %396 = vdwg.mxu0
    %v397 = vrot.slane %v394, 4
    %v398 = vadd.f32 %v394, %v397
    %v399 = vrot.slane %v398, 2
    %v400 = vadd.f32 %v398, %v399
    %v401 = vrot.slane %v400, 1
    %v402 = vadd.f32 %v400, %v401
    %v403 = vmul.f32 %v402, %v190
    %v404 = vsub.f32 %v394, %v403
    %v405 = vmul.f32 %v404, %v404
    %v406 = vrot.slane %v405, 4
    %v407 = vadd.f32 %v405, %v406
    %v408 = vrot.slane %v407, 2
    %v409 = vadd.f32 %v407, %v408
    %v410 = vrot.slane %v409, 1
    %v411 = vadd.f32 %v409, %v410
    %v412 = vmul.f32 %v411, %v190
    %v413 = vadd.f32 %v412, 1e-05
    %v414 = vrsqrt.pop %v413
    %v415 = vmul.f32 %v77, %v414
    %v417 = vlaneseq
    %v418 = vshrl.u32 %v417, 7
    %v419 = vsub.s32 0, %v418
    %v420 = vrot.slane %v415, %v419
    %v422 = vmul.f32 %v404, %v420
    %v424 = vlaneseq
    %v425 = vshrl.u32 %v424, 7
    %v426 = vsub.s32 0, %v425
    %v427 = vrot.slane %v78, %v426
    %v429 = vadd.f32 %v422, %v427
    %v430 = vmax.f32 %v429, 0.0
    %v431 = vld [vmem:[#allocation8] sm:$0xff]
    %v432 = vld [vmem:[#allocation8 + $0x8] sm:$0xff]
    %v433 = vld [vmem:[#allocation8 + $0x10] sm:$0xff]
    %v434 = vld [vmem:[#allocation8 + $0x18] sm:$0xff]
    %v435 = vld [vmem:[#allocation8 + $0x20] sm:$0xff]
    %v436 = vld [vmem:[#allocation8 + $0x28] sm:$0xff]
    %v437 = vld [vmem:[#allocation8 + $0x30] sm:$0xff]
    %v438 = vld [vmem:[#allocation8 + $0x38] sm:$0xff]
    %v439 = vld [vmem:[#allocation8 + $0x40] sm:$0xff]
    %v440 = vld [vmem:[#allocation8 + $0x48] sm:$0xff]
    %v441 = vld [vmem:[#allocation8 + $0x50] sm:$0xff]
    %v442 = vld [vmem:[#allocation8 + $0x58] sm:$0xff]
    %v443 = vld [vmem:[#allocation8 + $0x60] sm:$0xff]
    %v444 = vld [vmem:[#allocation8 + $0x68] sm:$0xff]
    %v445 = vld [vmem:[#allocation8 + $0x70] sm:$0xff]
    %v446 = vld [vmem:[#allocation8 + $0x78] sm:$0xff]
    %v447 = vld [vmem:[#allocation8 + $0x80] sm:$0xff]
    %v448 = vld [vmem:[#allocation8 + $0x88] sm:$0xff]
    %v449 = vld [vmem:[#allocation8 + $0x90] sm:$0xff]
    %v450 = vld [vmem:[#allocation8 + $0x98] sm:$0xff]
    %v451 = vld [vmem:[#allocation8 + $0xa0] sm:$0xff]
    %v452 = vld [vmem:[#allocation8 + $0xa8] sm:$0xff]
    %v453 = vld [vmem:[#allocation8 + $0xb0] sm:$0xff]
    %v454 = vld [vmem:[#allocation8 + $0xb8] sm:$0xff]
    %v455 = vld [vmem:[#allocation8 + $0xc0] sm:$0xff]
    %v456 = vld [vmem:[#allocation8 + $0xc8] sm:$0xff]
    %v457 = vld [vmem:[#allocation8 + $0xd0] sm:$0xff]
    %v458 = vld [vmem:[#allocation8 + $0xd8] sm:$0xff]
    %v459 = vld [vmem:[#allocation8 + $0xe0] sm:$0xff]
    %v460 = vld [vmem:[#allocation8 + $0xe8] sm:$0xff]
    %v461 = vld [vmem:[#allocation8 + $0xf0] sm:$0xff]
    %v462 = vld [vmem:[#allocation8 + $0xf8] sm:$0xff]
    %v464 = vlaneseq
    %v465 = vshrl.u32 %v464, 7
    %v466 = vsub.s32 0, %v465
    %v467 = vrot.slane %v79, %v466
    %v468 = vlaneseq
    %v469 = vshrl.u32 %v468, 7
    %v470 = vsub.s32 1, %v469
    %v471 = vrot.slane %v79, %v470
    %474 = vmatprep.subr.mxu0 %v432
    %475 = vmatpush1.msra.mxu0 %v431
    %476 = vmatprep.subr.mxu0 %v434
    %477 = vmatpush1.msra.mxu0 %v433
    %478 = vmatprep.subr.mxu0 %v436
    %479 = vmatpush1.msra.mxu0 %v435
    %480 = vmatprep.subr.mxu0 %v438
    %481 = vmatpush1.msra.mxu0 %v437
    %482 = vmatprep.subr.mxu0 %v440
    %483 = vmatpush1.msra.mxu0 %v439
    %484 = vmatprep.subr.mxu0 %v442
    %485 = vmatpush1.msra.mxu0 %v441
    %486 = vmatprep.subr.mxu0 %v444
    %487 = vmatpush1.msra.mxu0 %v443
    %488 = vmatprep.subr.mxu0 %v446
    %489 = vmatpush1.msra.mxu0 %v445
    %490 = vmatprep.subr.mxu0 %v448
    %491 = vmatpush1.msra.mxu0 %v447
    %492 = vmatprep.subr.mxu0 %v450
    %493 = vmatpush1.msra.mxu0 %v449
    %494 = vmatprep.subr.mxu0 %v452
    %495 = vmatpush1.msra.mxu0 %v451
    %496 = vmatprep.subr.mxu0 %v454
    %497 = vmatpush1.msra.mxu0 %v453
    %498 = vmatprep.subr.mxu0 %v456
    %499 = vmatpush1.msra.mxu0 %v455
    %500 = vmatprep.subr.mxu0 %v458
    %501 = vmatpush1.msra.mxu0 %v457
    %502 = vmatprep.subr.mxu0 %v460
    %503 = vmatpush1.msra.mxu0 %v459
    %504 = vmatprep.subr.mxu0 %v462
    %505 = vmatpush1.msra.mxu0 %v461
    %506 = vmatprep.subr.mxu0 0.0
    %507 = vmatpush1.msra.mxu0 0.0
    %508 = vmatprep.subr.mxu0 0.0
    %509 = vmatpush1.msra.mxu0 0.0
    %510 = vmatprep.subr.mxu0 0.0
    %511 = vmatpush1.msra.mxu0 0.0
    %512 = vmatprep.subr.mxu0 0.0
    %513 = vmatpush1.msra.mxu0 0.0
    %514 = vmatprep.subr.mxu0 0.0
    %515 = vmatpush1.msra.mxu0 0.0
    %516 = vmatprep.subr.mxu0 0.0
    %517 = vmatpush1.msra.mxu0 0.0
    %518 = vmatprep.subr.mxu0 0.0
    %519 = vmatpush1.msra.mxu0 0.0
    %520 = vmatprep.subr.mxu0 0.0
    %521 = vmatpush1.msra.mxu0 0.0
    %522 = vmatprep.subr.mxu0 0.0
    %523 = vmatpush1.msra.mxu0 0.0
    %524 = vmatprep.subr.mxu0 0.0
    %525 = vmatpush1.msra.mxu0 0.0
    %526 = vmatprep.subr.mxu0 0.0
    %527 = vmatpush1.msra.mxu0 0.0
    %528 = vmatprep.subr.mxu0 0.0
    %529 = vmatpush1.msra.mxu0 0.0
    %530 = vmatprep.subr.mxu0 0.0
    %531 = vmatpush1.msra.mxu0 0.0
    %532 = vmatprep.subr.mxu0 0.0
    %533 = vmatpush1.msra.mxu0 0.0
    %534 = vmatprep.subr.mxu0 0.0
    %535 = vmatpush1.msra.mxu0 0.0
    %536 = vmatprep.subr.mxu0 0.0
    %537 = vmatpush1.msra.mxu0 0.0
    %538 = vmatprep.mubr.f32.mxu0 0.0
    %539 = vmatmul.mubr.f32.gmra.mrb[0].mxu0 %v430
    %v540 = vpop.f32.mrb[0].mxu0
    %v541 = vadd.f32 %v467, %v540
    %v542 = vpop.f32.mrb[0].mxu0
    %v543 = vadd.f32 %v471, %v542
    %544 = vdwg.mxu0
    %v545 = vsub.f32 0.0, %v541
    %v546 = vsub.f32 0.0, %v543
    %v547 = vmul.f32 %v545, 1.442695
    %v548 = vpow.pop %v547
    %v549 = vmul.f32 %v546, 1.442695
    %v550 = vpow.pop %v549
    %v551 = vadd.f32 %v548, 1.0
    %v552 = vadd.f32 %v550, 1.0
    %v553 = vrcp.pop %v551
    %v554 = vrcp.pop %v552
    %555 = vst [vmem:[#allocation10] sm:$0xff] %v553
    %556 = vst [vmem:[#allocation10 + $0x8] sm:$0xff] %v554
    // Predicated region
    $region38: #{tpu_custom_call.1} parent=1 // pred_check
      _
    $region39: #{tpu_custom_call.1} parent=1 // pred_check_branch
      %558 = sbr.rel (0) target = $region41
    $region40: #{tpu_custom_call.1} parent=1 // pred_region
      %s560 = ssub.s32 256, 256
      %561 = vsyncadd [#allocation4], %s560
      %s563 = sshll.u32 [#allocation10], 4
      %s564 = int_to_ptr.vmem [resolvable:$true] %s563
      %566 = dma.vmem_to_hbm [thread:$0]  %s564, 256, %s5, [#allocation4]
    $region41: #{tpu_custom_call.1} parent=1 // pred_fallthru
      _
    // Predicated region
    $region42: #{tpu_custom_call.1} parent=1 // pred_check
      _
    $region43: #{tpu_custom_call.1} parent=1 // pred_check_branch
      %568 = sbr.rel (0) target = $region45
    $region44: #{tpu_custom_call.1} parent=1 // pred_region
      %569 = dma.done [#allocation4], 256
    $region45: #{tpu_custom_call.1} parent=1 // pred_fallthru
      _
    %570 = vsyncpa [#allocation3], 1
    %571 = vsyncpa [#allocation6], 1
    %572 = vsyncpa [#allocation9], 1
    %573 = vsyncpa [#allocation4], 1

</llo_original>
